<compile_context>
chip_gen: v5e
topology: v5e:2x2
jax: 0.10.0
libtpu: 0.0.40
codegen_flags: <defaults>
</compile_context>

<pallas_src>
import jax
import jax.numpy as jnp
from jax.experimental import pallas as pl
from jax.experimental.pallas import tpu as pltpu


_VMEM_BUDGET_BYTES = 40 * 1024 * 1024  # conservative across v5e / v6e / v7x


def _fc_mean_kernel(x_ref, w_ref, b_ref, mean_t_ref):
    # x_ref: [tb, I], w_ref: [O, I], b_ref: [O, 1] f32,
    # mean_t_ref: [O, tb] f32 (lane-dense: batch on lanes, O on sublanes).
    prec = jax.lax.Precision.HIGHEST if w_ref.dtype == jnp.float32 else None
    acc = jax.lax.dot_general(
        w_ref[...], x_ref[...],
        dimension_numbers=(((1,), (1,)), ((), ())),   # contract over I
        preferred_element_type=jnp.float32,
        precision=prec,
    )
    mean_t_ref[...] = acc + b_ref[...]                # bias broadcast over lanes (VPU)


def diag_gaussian_init(key, num_inputs, num_outputs, *, param_dtype=jnp.bfloat16):
    """nn.Linear-style init. Weight kept in [O, I] layout, streamed as bf16."""
    kw, kb = jax.random.split(key, 2)
    bound = 1.0 / (num_inputs ** 0.5)
    w = jax.random.uniform(kw, (num_outputs, num_inputs),
                           minval=-bound, maxval=bound, dtype=jnp.float32)
    b = jax.random.uniform(kb, (num_outputs,),
                           minval=-bound, maxval=bound, dtype=jnp.float32)
    logstd = jnp.zeros((num_outputs,), dtype=jnp.float32)   # AddBias(zeros)
    return {
        "w": w.astype(param_dtype),                    # [O, I] — MXU operand (bf16)
        "b_col": b.reshape(num_outputs, 1),            # [O, 1] f32 — post-accumulate add
        "logstd": logstd,
        # f32 copies kept only for reference checking:
        "w_f32": w,
        "b_f32": b,
    }


def _pick_batch_tile(B, I, O, block_b, x_itemsize, w_itemsize):
    """Batch tile (rows per grid step) + the VMEM bytes that choice needs."""
    fixed = O * I * w_itemsize + O * 4                 # resident weight + bias
    per_row = 2 * I * x_itemsize + 2 * O * 4           # dbl-buffered x tile + [O,tb] out tile
    max_tb_vmem = max(128, ((_VMEM_BUDGET_BYTES - fixed) // per_row) // 128 * 128)

    if B < 256:
        tb = B                                         # single whole-batch block
    else:
        tb = min(block_b, max_tb_vmem, B)
        tb = max(128, (tb // 128) * 128)               # lane-dense out => tb % 128 == 0
        if tb >= B:                                    # force >=2 steps (v7x megacore)
            tb = max(128, ((B // 2) // 128) * 128)
    vmem_need = fixed + per_row * tb
    return tb, vmem_need


def diag_gaussian_forward(params, x, *, block_b=2048):
    """Returns (mean [B, O] f32, scale [O] f32) for Normal(mean, scale)."""
    w = params["w"]            # [O, I]
    b_col = params["b_col"]    # [O, 1]
    logstd = params["logstd"]  # [O]

    if x.dtype != w.dtype:
        # TODO(synk): produce activations in bf16 upstream so this cast (an
        # extra HBM pass over x) disappears.
        x = x.astype(w.dtype)

    B, I = x.shape
    O = w.shape[0]

    tb, vmem_need = _pick_batch_tile(B, I, O, block_b,
                                     x.dtype.itemsize, w.dtype.itemsize)
    grid = (pl.cdiv(B, tb),)
    vmem_limit = int(min(max(vmem_need + (8 << 20), 32 << 20), 64 << 20))

    mean_t = pl.pallas_call(
        _fc_mean_kernel,
        out_shape=jax.ShapeDtypeStruct((O, B), jnp.float32),
        grid=grid,
        in_specs=[
            pl.BlockSpec((tb, I), lambda i: (i, 0)),   # stream x by batch tile
            pl.BlockSpec((O, I), lambda i: (0, 0)),    # weight stays VMEM-resident
            pl.BlockSpec((O, 1), lambda i: (0, 0)),    # bias column stays resident
        ],
        out_specs=pl.BlockSpec((O, tb), lambda i: (0, i)),  # lane-dense [O, tb] tile
        compiler_params=pltpu.CompilerParams(
            dimension_semantics=("parallel",),          # shard batch tiles across TCs
            vmem_limit_bytes=vmem_limit,
        ),
    )(x, w, b_col)

    mean = jnp.transpose(mean_t)          # [B, O]; B*O*4 bytes — negligible vs x read
    scale = jnp.exp(logstd)               # AddBias(zeros) -> logstd; batch-independent
    return mean, scale


if __name__ == "__main__":
    num_inputs, num_outputs = 32, 8
    key = jax.random.PRNGKey(0)
    kx1, kx2, kp = jax.random.split(key, 3)

    params = diag_gaussian_init(kp, num_inputs, num_outputs)

    # Case 1: small batch -> single whole-batch block (full-dim exemption).
    x1 = jax.random.normal(kx1, (16, num_inputs), dtype=jnp.float32)
    mean1, scale1 = diag_gaussian_forward(params, x1)

    # Case 2: multi-step grid with a partial last tile (272 = 2*128 + 16).
    x2 = jax.random.normal(kx2, (272, num_inputs), dtype=jnp.float32)
    mean2, scale2 = diag_gaussian_forward(params, x2, block_b=128)

    jax.block_until_ready((mean1, scale1, mean2, scale2))

    w_bf_as_f32 = params["w"].astype(jnp.float32)
    scale_ref = jnp.exp(params["logstd"])
    for x, mean in ((x1, mean1), (x2, mean2)):
        assert mean.shape == (x.shape[0], num_outputs)
        # Tight check against the bf16-stream math the kernel actually does:
        ref_bf = (x.astype(jnp.bfloat16).astype(jnp.float32) @ w_bf_as_f32.T
                  + params["b_f32"])
        assert jnp.allclose(mean, ref_bf, atol=1e-3, rtol=1e-3)
        # Sanity check against the full-f32 PyTorch-equivalent math:
        ref_f32 = x @ params["w_f32"].T + params["b_f32"]
        assert jnp.allclose(mean, ref_f32, atol=5e-2, rtol=5e-2)

    assert jnp.allclose(scale1, scale_ref, atol=1e-6, rtol=1e-6)
    assert jnp.allclose(scale2, scale_ref, atol=1e-6, rtol=1e-6)
    # Full distribution parameterization matches Normal(mean, exp(logstd)).
    assert jnp.allclose(jnp.broadcast_to(scale1, mean1.shape),
                        jnp.broadcast_to(scale_ref, mean1.shape))

    print("KERNEL_OK")
</pallas_src>

<mosaic_0001>
module attributes {stable_mosaic.version = 11 : i64} {
  func.func @_fc_mean_kernel(%arg0: i32, %arg1: memref<16x32xbf16, #tpu.memory_space<vmem>>, %arg2: memref<8x32xbf16, #tpu.memory_space<vmem>>, %arg3: memref<8x1xf32, #tpu.memory_space<vmem>>, %arg4: memref<8x16xf32, #tpu.memory_space<vmem>>) attributes {dimension_semantics = [#tpu.dimension_semantics<parallel>], iteration_bounds = array<i64: 1>, scalar_prefetch = 0 : i64, scratch_operands = 0 : i64, tpu.core_type = #tpu.core_type<tc>, window_params = [{transform_indices = @transform_0, window_bounds = array<i64: 16, 32>}, {pipeline_mode = #tpu.pipeline_mode<synchronous>, transform_indices = @transform_1, window_bounds = array<i64: 8, 32>}, {pipeline_mode = #tpu.pipeline_mode<synchronous>, transform_indices = @transform_2, window_bounds = array<i64: 8, 1>}, {transform_indices = @transform_3, window_bounds = array<i64: 8, 16>}]} {
    %c0 = arith.constant 0 : index
    %c0_0 = arith.constant 0 : index
    %0 = vector.load %arg2[%c0, %c0_0] : memref<8x32xbf16, #tpu.memory_space<vmem>>, vector<8x32xbf16>
    %c0_1 = arith.constant 0 : index
    %c0_2 = arith.constant 0 : index
    %1 = vector.load %arg1[%c0_1, %c0_2] : memref<16x32xbf16, #tpu.memory_space<vmem>>, vector<16x32xbf16>
    %cst = arith.constant dense<0.000000e+00> : vector<8x16xf32>
    %2 = tpu.matmul %0, %1, %cst {dimension_numbers = #tpu.dot_dimension_numbers<[1], [1], [0], [0], [0, 0, 1, 0], [], []>} : vector<8x32xbf16>, vector<16x32xbf16>, vector<8x16xf32> -> vector<8x16xf32>
    %c0_3 = arith.constant 0 : index
    %c0_4 = arith.constant 0 : index
    %3 = vector.load %arg3[%c0_3, %c0_4] : memref<8x1xf32, #tpu.memory_space<vmem>>, vector<8x1xf32>
    %4 = vector.broadcast %3 : vector<8x1xf32> to vector<8x16xf32>
    %5 = arith.addf %2, %4 : vector<8x16xf32>
    %c0_5 = arith.constant 0 : index
    %c0_6 = arith.constant 0 : index
    %6 = vector.load %arg4[%c0_5, %c0_6] : memref<8x16xf32, #tpu.memory_space<vmem>>, vector<8x16xf32>
    tpu.vector_store %arg4[%c0_5, %c0_6], %5 {strides = array<i32>} : memref<8x16xf32, #tpu.memory_space<vmem>>, vector<8x16xf32>,
    return
  }
  func.func @transform_0(%arg0: i32) -> (i32, i32) {
    %c0_i32 = arith.constant 0 : i32
    %c0_i32_0 = arith.constant 0 : i32
    return %arg0, %c0_i32 : i32, i32
  }
  func.func @transform_1(%arg0: i32) -> (i32, i32) {
    %c0_i32 = arith.constant 0 : i32
    %c0_i32_0 = arith.constant 0 : i32
    %c0_i32_1 = arith.constant 0 : i32
    return %c0_i32, %c0_i32_0 : i32, i32
  }
  func.func @transform_2(%arg0: i32) -> (i32, i32) {
    %c0_i32 = arith.constant 0 : i32
    %c0_i32_0 = arith.constant 0 : i32
    %c0_i32_1 = arith.constant 0 : i32
    return %c0_i32, %c0_i32_0 : i32, i32
  }
  func.func @transform_3(%arg0: i32) -> (i32, i32) {
    %c0_i32 = arith.constant 0 : i32
    %c0_i32_0 = arith.constant 0 : i32
    return %c0_i32, %arg0 : i32, i32
  }
}

</mosaic_0001>

<llo_original>
// kernel: tpu_custom_call.1
$region0: #{tpu_custom_call.1}
  #allocation0 [shape = 'u32[]', space=smem, size = 0x4, offset = 0x4, fixed_abs, tag = 'smem constant byte address 0x4 - core index']
  #allocation1 [shape = 'u32[72,128]{1,0:T(1,128)}', space=vmem, size = 0x9000, scoped, tag = 'internal scratch']
  %s0 = inlined_call_operand.vmem [shape: bf16[16,32], index: 0, kind: input, shape index: {}]
  %s1 = inlined_call_operand.hbm [shape: bf16[8,32], index: 1, kind: input, shape index: {}]
  %s2 = inlined_call_operand.vmem [shape: f32[8,1], index: 2, kind: input, shape index: {}]
  %s3 = inlined_call_operand.hbm [shape: f32[8,16], index: 3, kind: output, shape index: {}]
  %s4 = sld [smem:[#allocation0]]
  $region26: #{tpu_custom_call.1} parent=0
    _
  %s6 = ssub.s32 1, %s4
  %s7 = scalar_select 0, %s6, %s4
  $region1: #{tpu_custom_call.1} parent=0
    #allocation2 [shape = 'u8[2048]{0}', space=vmem, size = 0x800, scoped, tag = 'input window, operand 1, single buffered']
    #allocation3 [shape = 's32[1]{0}', space=sflag, size = 0x4, scoped, tag = 'scoped memory for tpu_custom_call.1']
    #allocation4 [shape = 's32[1]{0}', space=sflag, size = 0x4, scoped, tag = 'scoped memory for tpu_custom_call.1']
    #allocation5 [shape = 'u8[4096]{0}', space=vmem, size = 0x1000, scoped, tag = 'output window, operand 0, single buffered']
    %8 = vsyncpa [#allocation3], 0
    %9 = vsyncpa [#allocation4], 0
    // Predicated region
    $region2: #{tpu_custom_call.1} parent=1 // pred_check
      _
    $region3: #{tpu_custom_call.1} parent=1 // pred_check_branch
      %11 = sbr.rel (0) target = $region5
    $region4: #{tpu_custom_call.1} parent=1 // pred_region
      _
    $region5: #{tpu_custom_call.1} parent=1 // pred_fallthru
      _
    // Predicated region
    $region6: #{tpu_custom_call.1} parent=1 // pred_check
      _
    $region7: #{tpu_custom_call.1} parent=1 // pred_check_branch
      %13 = sbr.rel (0) target = $region9
    $region8: #{tpu_custom_call.1} parent=1 // pred_region
      %15 = vsyncadd [#allocation3], 0
      %s17 = sshll.u32 %s1, 4
      %s18 = int_to_ptr.hbm [resolvable:$true] %s17
      %s19 = sshll.u32 [#allocation2], 4
      %s20 = int_to_ptr.vmem [resolvable:$true] %s19
      %22 = dma.hbm_to_vmem [thread:$0]  %s18, 64, %s20, [#allocation3]
    $region9: #{tpu_custom_call.1} parent=1 // pred_fallthru
      _
    // Predicated region
    $region10: #{tpu_custom_call.1} parent=1 // pred_check
      _
    $region11: #{tpu_custom_call.1} parent=1 // pred_check_branch
      %24 = sbr.rel (0) target = $region13
    $region12: #{tpu_custom_call.1} parent=1 // pred_region
      _
    $region13: #{tpu_custom_call.1} parent=1 // pred_fallthru
      _
    // Predicated region
    $region14: #{tpu_custom_call.1} parent=1 // pred_check
      _
    $region15: #{tpu_custom_call.1} parent=1 // pred_check_branch
      %26 = sbr.rel (0) target = $region17
    $region16: #{tpu_custom_call.1} parent=1 // pred_region
      %28 = dma.done [#allocation3], 64
    $region17: #{tpu_custom_call.1} parent=1 // pred_fallthru
      _
    %v30 = vld [vmem:[#allocation2] sm:$0xf]
    %v31 = vld [vmem:[%s0] sm:$0xf]
    %v32 = vld [vmem:[%s0 + $0x4] sm:$0xf]
    %v33 = vld [vmem:[%s2] sm:$0xff]
    %35 = vset.pattern.permute.xlu0 0
    %36 = vperm.xlu0 %35, %v33
    %v37 = vpop.permute.xlu0 %36
    %v41 = vunpack.c.l.b16 %v31
    %v42 = vunpack.c.l.b16 %v32
    %v43 = vpack.c.b16 %v42, %v41
    %vm44 = vcmask 261120
    %v46 = vsel %vm44, %v30, 0
    %v49 = vsel %vm44, %v43, 0
    %51 = vmatpush.bf16.xpose.msra.mxu0 0
    %52 = vmatpush.bf16.xpose.msra.mxu0 0
    %53 = vmatpush.bf16.xpose.msra.mxu0 0
    %54 = vmatpush.bf16.xpose.msra.mxu0 0
    %55 = vmatpush.bf16.xpose.msra.mxu0 0
    %56 = vmatpush.bf16.xpose.msra.mxu0 0
    %57 = vmatpush.bf16.xpose.msra.mxu0 0
    %58 = vmatpush.bf16.xpose.msra.mxu0 %v49
    %59 = vmatmul.bf16.gmra.mxu0 %v46
    %v60 = vpop.f32.mrf.mxu0
    %v61 = vadd.f32 %v37, %v60
    %v62 = vpop.f32.mrf.mxu0
    %63 = vdwg.mxu0
    %vm64 = vcmask 130048
    %65 = vst.msk [vmem:[#allocation5] sm:$0xff] %vm64, %v61
    // Predicated region
    $region18: #{tpu_custom_call.1} parent=1 // pred_check
      _
    $region19: #{tpu_custom_call.1} parent=1 // pred_check_branch
      %67 = sbr.rel (0) target = $region21
    $region20: #{tpu_custom_call.1} parent=1 // pred_region
      %69 = vsyncadd [#allocation4], 0
      %s71 = sshll.u32 [#allocation5], 4
      %s72 = int_to_ptr.vmem [resolvable:$true] %s71
      %s73 = sshll.u32 %s3, 4
      %s74 = int_to_ptr.hbm [resolvable:$true] %s73
      %76 = dma.vmem_to_hbm [thread:$0]  %s72, 128, %s74, [#allocation4]
    $region21: #{tpu_custom_call.1} parent=1 // pred_fallthru
      _
    // Predicated region
    $region22: #{tpu_custom_call.1} parent=1 // pred_check
      _
    $region23: #{tpu_custom_call.1} parent=1 // pred_check_branch
      %78 = sbr.rel (0) target = $region25
    $region24: #{tpu_custom_call.1} parent=1 // pred_region
      %80 = dma.done [#allocation4], 128
    $region25: #{tpu_custom_call.1} parent=1 // pred_fallthru
      _
    %81 = vsyncpa [#allocation3], 1
    %82 = vsyncpa [#allocation4], 1

</llo_original>
